<compile_context>
chip_gen: v5e
topology: v5e:2x2
jax: 0.10.0
libtpu: 0.0.40
codegen_flags: <defaults>
</compile_context>

<pallas_src>
import math

import jax
import jax.numpy as jnp
from jax.experimental import pallas as pl
from jax.experimental.pallas import tpu as pltpu

_NUM_LAYERS = 7  # hidden1..hidden6 + predict


def _round_up(x, m):
    return ((x + m - 1) // m) * m


def _mlp_kernel(x_ref, w_ref, b_ref, out_ref):
    """Fused forward pass for one batch tile.

    x_ref  : (TB, D)     bf16  zero-padded activations
    w_ref  : (7, D, D)   bf16  packed, zero-padded weights (in, out layout)
    b_ref  : (7, 1, D)   f32   packed, zero-padded biases
    out_ref: (TB, D)     f32   lane-dense output (cols >= n_output are zero)
    """
    h = x_ref[...]  # bf16 (TB, D) — already cast in the wrapper, no extra astype
    # 6 hidden layers: bf16 MXU matmul, f32 accumulate, f32 bias+ReLU.
    for l in range(_NUM_LAYERS - 1):
        z = jnp.dot(h, w_ref[l], preferred_element_type=jnp.float32) + b_ref[l]
        h = jnp.maximum(z, 0.0).astype(jnp.bfloat16)
    # Final predict layer (no activation), stored full-width (lane-dense).
    out_ref[...] = (
        jnp.dot(h, w_ref[_NUM_LAYERS - 1], preferred_element_type=jnp.float32)
        + b_ref[_NUM_LAYERS - 1]
    ).astype(out_ref.dtype)


def pack_params(params, d_pad):
    """Zero-pad every layer to (d_pad, d_pad) / (1, d_pad) and stack."""
    ws, bs = [], []
    for (w, b) in params:
        fan_in, fan_out = w.shape
        w_p = jnp.zeros((d_pad, d_pad), jnp.float32).at[:fan_in, :fan_out].set(w)
        b_p = jnp.zeros((1, d_pad), jnp.float32).at[0, :fan_out].set(b)
        ws.append(w_p)
        bs.append(b_p)
    w_packed = jnp.stack(ws).astype(jnp.bfloat16)  # (7, D, D) bf16 (MXU operand)
    b_packed = jnp.stack(bs)                       # (7, 1, D) f32  (VPU operand)
    return w_packed, b_packed


def net_forward(x, params, *, batch_tile=512):
    """x: (B, n_feature) float32; params: list of 7 (W(in,out), b(out,)) pairs."""
    B, n_feature = x.shape
    n_hidden = params[0][0].shape[1]
    n_output = params[-1][0].shape[1]

    # Common padded width so the packed weight tensor is rectangular and every
    # op is lane-dense (multiple of 128).
    d_pad = _round_up(max(n_feature, n_hidden, n_output), 128)

    w_packed, b_packed = pack_params(params, d_pad)

    # Batch tiling: one padded block for small B, 512-row pipelined tiles for
    # large B (parallel grid axis -> shards across TensorCores on v7x).
    if B <= batch_tile:
        tb = _round_up(max(B, 16), 16)  # bf16-friendly sublane count
    else:
        tb = batch_tile
    b_pad = _round_up(B, tb)
    num_tiles = b_pad // tb

    x_p = jnp.zeros((b_pad, d_pad), jnp.bfloat16)
    x_p = x_p.at[:B, :n_feature].set(x.astype(jnp.bfloat16))

    out = pl.pallas_call(
        _mlp_kernel,
        out_shape=jax.ShapeDtypeStruct((b_pad, d_pad), jnp.float32),
        grid_spec=pltpu.PrefetchScalarGridSpec(
            num_scalar_prefetch=0,
            grid=(num_tiles,),
            in_specs=[
                pl.BlockSpec((tb, d_pad), lambda i: (i, 0)),                  # x tile
                pl.BlockSpec((_NUM_LAYERS, d_pad, d_pad), lambda i: (0, 0, 0)),  # weights (VMEM-resident)
                pl.BlockSpec((_NUM_LAYERS, 1, d_pad), lambda i: (0, 0, 0)),      # biases (VMEM-resident)
            ],
            out_specs=pl.BlockSpec((tb, d_pad), lambda i: (i, 0)),
        ),
        compiler_params=pltpu.CompilerParams(
            dimension_semantics=("parallel",),
        ),
    )(x_p, w_packed, b_packed)

    # Slice away batch padding and lane padding.
    return out[:B, :n_output]


def init_params(key, n_feature, n_hidden, n_output):
    """Deterministic init mirroring torch.nn.Linear default (U[-1/sqrt(fan_in), +])."""
    dims = [(n_feature, n_hidden)] + [(n_hidden, n_hidden)] * 5 + [(n_hidden, n_output)]
    params = []
    for (fan_in, fan_out) in dims:
        key, kw, kb = jax.random.split(key, 3)
        bound = 1.0 / math.sqrt(fan_in)
        w = jax.random.uniform(kw, (fan_in, fan_out), jnp.float32, -bound, bound)
        b = jax.random.uniform(kb, (fan_out,), jnp.float32, -bound, bound)
        params.append((w, b))
    return params


def net_forward_ref(x, params, *, mxu_bf16=True):
    """Plain-JAX reference (optionally with the same bf16-operand matmuls)."""
    h = x.astype(jnp.float32)
    for i, (w, b) in enumerate(params):
        if mxu_bf16:
            z = jnp.dot(h.astype(jnp.bfloat16), w.astype(jnp.bfloat16),
                        preferred_element_type=jnp.float32) + b
        else:
            z = h @ w + b
        h = jnp.maximum(z, 0.0) if i < len(params) - 1 else z
    return h


if __name__ == "__main__":
    key = jax.random.PRNGKey(0)
    k_params, k_x = jax.random.split(key)

    B, n_feature, n_hidden, n_output = 8, 16, 32, 4
    params = init_params(k_params, n_feature, n_hidden, n_output)
    x = jax.random.normal(k_x, (B, n_feature), jnp.float32)

    out = jax.block_until_ready(net_forward(x, params))
    assert out.shape == (B, n_output), out.shape

    # Exact-semantics check (same bf16 MXU operands, f32 accumulate/elementwise).
    ref_bf16 = net_forward_ref(x, params, mxu_bf16=True)
    assert jnp.allclose(out, ref_bf16, atol=2e-3, rtol=2e-3), "mismatch vs bf16-matmul reference"

    # Loose sanity check against the full-f32 PyTorch-equivalent math.
    ref_f32 = net_forward_ref(x, params, mxu_bf16=False)
    assert jnp.allclose(out, ref_f32, atol=5e-2, rtol=5e-2), "mismatch vs f32 reference"

    print("KERNEL_OK")
</pallas_src>

<mosaic_0001>
module attributes {stable_mosaic.version = 11 : i64} {
  func.func @_mlp_kernel(%arg0: i32, %arg1: memref<16x128xbf16, #tpu.memory_space<vmem>>, %arg2: memref<7x128x128xbf16, #tpu.memory_space<vmem>>, %arg3: memref<7x1x128xf32, #tpu.memory_space<vmem>>, %arg4: memref<16x128xf32, #tpu.memory_space<vmem>>) attributes {dimension_semantics = [#tpu.dimension_semantics<parallel>], iteration_bounds = array<i64: 1>, scalar_prefetch = 0 : i64, scratch_operands = 0 : i64, tpu.core_type = #tpu.core_type<tc>, window_params = [{transform_indices = @transform_0, window_bounds = array<i64: 16, 128>}, {pipeline_mode = #tpu.pipeline_mode<synchronous>, transform_indices = @transform_1, window_bounds = array<i64: 7, 128, 128>}, {pipeline_mode = #tpu.pipeline_mode<synchronous>, transform_indices = @transform_2, window_bounds = array<i64: 7, 1, 128>}, {transform_indices = @transform_3, window_bounds = array<i64: 16, 128>}]} {
    %c0 = arith.constant 0 : index
    %c0_0 = arith.constant 0 : index
    %0 = vector.load %arg1[%c0, %c0_0] : memref<16x128xbf16, #tpu.memory_space<vmem>>, vector<16x128xbf16>
    %c0_1 = arith.constant 0 : index
    %c0_2 = arith.constant 0 : index
    %c0_3 = arith.constant 0 : index
    %1 = vector.load %arg2[%c0_1, %c0_2, %c0_3] : memref<7x128x128xbf16, #tpu.memory_space<vmem>>, vector<1x128x128xbf16>
    %2 = vector.shape_cast %1 : vector<1x128x128xbf16> to vector<128x128xbf16>
    %cst = arith.constant dense<0.000000e+00> : vector<16x128xf32>
    %3 = tpu.matmul %0, %2, %cst {dimension_numbers = #tpu.dot_dimension_numbers<[1], [0], [0], [1], [0, 0, 1, 1], [], []>} : vector<16x128xbf16>, vector<128x128xbf16>, vector<16x128xf32> -> vector<16x128xf32>
    %c0_4 = arith.constant 0 : index
    %c0_5 = arith.constant 0 : index
    %c0_6 = arith.constant 0 : index
    %4 = vector.load %arg3[%c0_4, %c0_5, %c0_6] : memref<7x1x128xf32, #tpu.memory_space<vmem>>, vector<1x1x128xf32>
    %5 = vector.shape_cast %4 : vector<1x1x128xf32> to vector<1x128xf32>
    %6 = vector.broadcast %5 : vector<1x128xf32> to vector<16x128xf32>
    %7 = arith.addf %3, %6 : vector<16x128xf32>
    %cst_7 = arith.constant 0.000000e+00 : f32
    %8 = vector.broadcast %cst_7 : f32 to vector<16x128xf32>
    %9 = arith.maximumf %7, %8 : vector<16x128xf32>
    %10 = arith.truncf %9 : vector<16x128xf32> to vector<16x128xbf16>
    %c1 = arith.constant 1 : index
    %c0_8 = arith.constant 0 : index
    %c0_9 = arith.constant 0 : index
    %11 = vector.load %arg2[%c1, %c0_8, %c0_9] : memref<7x128x128xbf16, #tpu.memory_space<vmem>>, vector<1x128x128xbf16>
    %12 = vector.shape_cast %11 : vector<1x128x128xbf16> to vector<128x128xbf16>
    %cst_10 = arith.constant dense<0.000000e+00> : vector<16x128xf32>
    %13 = tpu.matmul %10, %12, %cst_10 {dimension_numbers = #tpu.dot_dimension_numbers<[1], [0], [0], [1], [0, 0, 1, 1], [], []>} : vector<16x128xbf16>, vector<128x128xbf16>, vector<16x128xf32> -> vector<16x128xf32>
    %c1_11 = arith.constant 1 : index
    %c0_12 = arith.constant 0 : index
    %c0_13 = arith.constant 0 : index
    %14 = vector.load %arg3[%c1_11, %c0_12, %c0_13] : memref<7x1x128xf32, #tpu.memory_space<vmem>>, vector<1x1x128xf32>
    %15 = vector.shape_cast %14 : vector<1x1x128xf32> to vector<1x128xf32>
    %16 = vector.broadcast %15 : vector<1x128xf32> to vector<16x128xf32>
    %17 = arith.addf %13, %16 : vector<16x128xf32>
    %cst_14 = arith.constant 0.000000e+00 : f32
    %18 = vector.broadcast %cst_14 : f32 to vector<16x128xf32>
    %19 = arith.maximumf %17, %18 : vector<16x128xf32>
    %20 = arith.truncf %19 : vector<16x128xf32> to vector<16x128xbf16>
    %c2 = arith.constant 2 : index
    %c0_15 = arith.constant 0 : index
    %c0_16 = arith.constant 0 : index
    %21 = vector.load %arg2[%c2, %c0_15, %c0_16] : memref<7x128x128xbf16, #tpu.memory_space<vmem>>, vector<1x128x128xbf16>
    %22 = vector.shape_cast %21 : vector<1x128x128xbf16> to vector<128x128xbf16>
    %cst_17 = arith.constant dense<0.000000e+00> : vector<16x128xf32>
    %23 = tpu.matmul %20, %22, %cst_17 {dimension_numbers = #tpu.dot_dimension_numbers<[1], [0], [0], [1], [0, 0, 1, 1], [], []>} : vector<16x128xbf16>, vector<128x128xbf16>, vector<16x128xf32> -> vector<16x128xf32>
    %c2_18 = arith.constant 2 : index
    %c0_19 = arith.constant 0 : index
    %c0_20 = arith.constant 0 : index
    %24 = vector.load %arg3[%c2_18, %c0_19, %c0_20] : memref<7x1x128xf32, #tpu.memory_space<vmem>>, vector<1x1x128xf32>
    %25 = vector.shape_cast %24 : vector<1x1x128xf32> to vector<1x128xf32>
    %26 = vector.broadcast %25 : vector<1x128xf32> to vector<16x128xf32>
    %27 = arith.addf %23, %26 : vector<16x128xf32>
    %cst_21 = arith.constant 0.000000e+00 : f32
    %28 = vector.broadcast %cst_21 : f32 to vector<16x128xf32>
    %29 = arith.maximumf %27, %28 : vector<16x128xf32>
    %30 = arith.truncf %29 : vector<16x128xf32> to vector<16x128xbf16>
    %c3 = arith.constant 3 : index
    %c0_22 = arith.constant 0 : index
    %c0_23 = arith.constant 0 : index
    %31 = vector.load %arg2[%c3, %c0_22, %c0_23] : memref<7x128x128xbf16, #tpu.memory_space<vmem>>, vector<1x128x128xbf16>
    %32 = vector.shape_cast %31 : vector<1x128x128xbf16> to vector<128x128xbf16>
    %cst_24 = arith.constant dense<0.000000e+00> : vector<16x128xf32>
    %33 = tpu.matmul %30, %32, %cst_24 {dimension_numbers = #tpu.dot_dimension_numbers<[1], [0], [0], [1], [0, 0, 1, 1], [], []>} : vector<16x128xbf16>, vector<128x128xbf16>, vector<16x128xf32> -> vector<16x128xf32>
    %c3_25 = arith.constant 3 : index
    %c0_26 = arith.constant 0 : index
    %c0_27 = arith.constant 0 : index
    %34 = vector.load %arg3[%c3_25, %c0_26, %c0_27] : memref<7x1x128xf32, #tpu.memory_space<vmem>>, vector<1x1x128xf32>
    %35 = vector.shape_cast %34 : vector<1x1x128xf32> to vector<1x128xf32>
    %36 = vector.broadcast %35 : vector<1x128xf32> to vector<16x128xf32>
    %37 = arith.addf %33, %36 : vector<16x128xf32>
    %cst_28 = arith.constant 0.000000e+00 : f32
    %38 = vector.broadcast %cst_28 : f32 to vector<16x128xf32>
    %39 = arith.maximumf %37, %38 : vector<16x128xf32>
    %40 = arith.truncf %39 : vector<16x128xf32> to vector<16x128xbf16>
    %c4 = arith.constant 4 : index
    %c0_29 = arith.constant 0 : index
    %c0_30 = arith.constant 0 : index
    %41 = vector.load %arg2[%c4, %c0_29, %c0_30] : memref<7x128x128xbf16, #tpu.memory_space<vmem>>, vector<1x128x128xbf16>
    %42 = vector.shape_cast %41 : vector<1x128x128xbf16> to vector<128x128xbf16>
    %cst_31 = arith.constant dense<0.000000e+00> : vector<16x128xf32>
    %43 = tpu.matmul %40, %42, %cst_31 {dimension_numbers = #tpu.dot_dimension_numbers<[1], [0], [0], [1], [0, 0, 1, 1], [], []>} : vector<16x128xbf16>, vector<128x128xbf16>, vector<16x128xf32> -> vector<16x128xf32>
    %c4_32 = arith.constant 4 : index
    %c0_33 = arith.constant 0 : index
    %c0_34 = arith.constant 0 : index
    %44 = vector.load %arg3[%c4_32, %c0_33, %c0_34] : memref<7x1x128xf32, #tpu.memory_space<vmem>>, vector<1x1x128xf32>
    %45 = vector.shape_cast %44 : vector<1x1x128xf32> to vector<1x128xf32>
    %46 = vector.broadcast %45 : vector<1x128xf32> to vector<16x128xf32>
    %47 = arith.addf %43, %46 : vector<16x128xf32>
    %cst_35 = arith.constant 0.000000e+00 : f32
    %48 = vector.broadcast %cst_35 : f32 to vector<16x128xf32>
    %49 = arith.maximumf %47, %48 : vector<16x128xf32>
    %50 = arith.truncf %49 : vector<16x128xf32> to vector<16x128xbf16>
    %c5 = arith.constant 5 : index
    %c0_36 = arith.constant 0 : index
    %c0_37 = arith.constant 0 : index
    %51 = vector.load %arg2[%c5, %c0_36, %c0_37] : memref<7x128x128xbf16, #tpu.memory_space<vmem>>, vector<1x128x128xbf16>
    %52 = vector.shape_cast %51 : vector<1x128x128xbf16> to vector<128x128xbf16>
    %cst_38 = arith.constant dense<0.000000e+00> : vector<16x128xf32>
    %53 = tpu.matmul %50, %52, %cst_38 {dimension_numbers = #tpu.dot_dimension_numbers<[1], [0], [0], [1], [0, 0, 1, 1], [], []>} : vector<16x128xbf16>, vector<128x128xbf16>, vector<16x128xf32> -> vector<16x128xf32>
    %c5_39 = arith.constant 5 : index
    %c0_40 = arith.constant 0 : index
    %c0_41 = arith.constant 0 : index
    %54 = vector.load %arg3[%c5_39, %c0_40, %c0_41] : memref<7x1x128xf32, #tpu.memory_space<vmem>>, vector<1x1x128xf32>
    %55 = vector.shape_cast %54 : vector<1x1x128xf32> to vector<1x128xf32>
    %56 = vector.broadcast %55 : vector<1x128xf32> to vector<16x128xf32>
    %57 = arith.addf %53, %56 : vector<16x128xf32>
    %cst_42 = arith.constant 0.000000e+00 : f32
    %58 = vector.broadcast %cst_42 : f32 to vector<16x128xf32>
    %59 = arith.maximumf %57, %58 : vector<16x128xf32>
    %60 = arith.truncf %59 : vector<16x128xf32> to vector<16x128xbf16>
    %c6 = arith.constant 6 : index
    %c0_43 = arith.constant 0 : index
    %c0_44 = arith.constant 0 : index
    %61 = vector.load %arg2[%c6, %c0_43, %c0_44] : memref<7x128x128xbf16, #tpu.memory_space<vmem>>, vector<1x128x128xbf16>
    %62 = vector.shape_cast %61 : vector<1x128x128xbf16> to vector<128x128xbf16>
    %cst_45 = arith.constant dense<0.000000e+00> : vector<16x128xf32>
    %63 = tpu.matmul %60, %62, %cst_45 {dimension_numbers = #tpu.dot_dimension_numbers<[1], [0], [0], [1], [0, 0, 1, 1], [], []>} : vector<16x128xbf16>, vector<128x128xbf16>, vector<16x128xf32> -> vector<16x128xf32>
    %c6_46 = arith.constant 6 : index
    %c0_47 = arith.constant 0 : index
    %c0_48 = arith.constant 0 : index
    %64 = vector.load %arg3[%c6_46, %c0_47, %c0_48] : memref<7x1x128xf32, #tpu.memory_space<vmem>>, vector<1x1x128xf32>
    %65 = vector.shape_cast %64 : vector<1x1x128xf32> to vector<1x128xf32>
    %66 = vector.broadcast %65 : vector<1x128xf32> to vector<16x128xf32>
    %67 = arith.addf %63, %66 : vector<16x128xf32>
    %c0_49 = arith.constant 0 : index
    %c0_50 = arith.constant 0 : index
    %68 = vector.load %arg4[%c0_49, %c0_50] : memref<16x128xf32, #tpu.memory_space<vmem>>, vector<16x128xf32>
    tpu.vector_store %arg4[%c0_49, %c0_50], %67 {strides = array<i32>} : memref<16x128xf32, #tpu.memory_space<vmem>>, vector<16x128xf32>,
    return
  }
  func.func @transform_0(%arg0: i32) -> (i32, i32) {
    %c0_i32 = arith.constant 0 : i32
    %c0_i32_0 = arith.constant 0 : i32
    return %arg0, %c0_i32 : i32, i32
  }
  func.func @transform_1(%arg0: i32) -> (i32, i32, i32) {
    %c0_i32 = arith.constant 0 : i32
    %c0_i32_0 = arith.constant 0 : i32
    %c0_i32_1 = arith.constant 0 : i32
    %c0_i32_2 = arith.constant 0 : i32
    return %c0_i32, %c0_i32_0, %c0_i32_1 : i32, i32, i32
  }
  func.func @transform_2(%arg0: i32) -> (i32, i32, i32) {
    %c0_i32 = arith.constant 0 : i32
    %c0_i32_0 = arith.constant 0 : i32
    %c0_i32_1 = arith.constant 0 : i32
    %c0_i32_2 = arith.constant 0 : i32
    return %c0_i32, %c0_i32_0, %c0_i32_1 : i32, i32, i32
  }
  func.func @transform_3(%arg0: i32) -> (i32, i32) {
    %c0_i32 = arith.constant 0 : i32
    %c0_i32_0 = arith.constant 0 : i32
    return %arg0, %c0_i32 : i32, i32
  }
}

</mosaic_0001>

<llo_original>
// kernel: tpu_custom_call.1
$region0: #{tpu_custom_call.1}
  #allocation0 [shape = 'u32[]', space=smem, size = 0x4, offset = 0x4, fixed_abs, tag = 'smem constant byte address 0x4 - core index']
  #allocation1 [shape = 'u32[72,128]{1,0:T(1,128)}', space=vmem, size = 0x9000, scoped, tag = 'internal scratch']
  %s0 = inlined_call_operand.hbm [shape: bf16[16,128], index: 0, kind: input, shape index: {}]
  %s1 = inlined_call_operand.hbm [shape: bf16[7,128,128], index: 1, kind: input, shape index: {}]
  %s2 = inlined_call_operand.hbm [shape: f32[7,1,128], index: 2, kind: input, shape index: {}]
  %s3 = inlined_call_operand.hbm [shape: f32[16,128], index: 3, kind: output, shape index: {}]
  %s4 = sld [smem:[#allocation0]]
  $region34: #{tpu_custom_call.1} parent=0
    _
  %s6 = ssub.s32 1, %s4
  %s7 = scalar_select 0, %s6, %s4
  $region1: #{tpu_custom_call.1} parent=0
    #allocation2 [shape = 'u8[4096]{0}', space=vmem, size = 0x1000, scoped, tag = 'input window, operand 0, single buffered']
    #allocation3 [shape = 's32[1]{0}', space=sflag, size = 0x4, scoped, tag = 'scoped memory for tpu_custom_call.1']
    #allocation4 [shape = 's32[1]{0}', space=sflag, size = 0x4, scoped, tag = 'scoped memory for tpu_custom_call.1']
    #allocation5 [shape = 'u8[229376]{0}', space=vmem, size = 0x38000, scoped, tag = 'input window, operand 1, single buffered']
    #allocation6 [shape = 's32[1]{0}', space=sflag, size = 0x4, scoped, tag = 'scoped memory for tpu_custom_call.1']
    #allocation7 [shape = 'u8[3584]{0}', space=vmem, size = 0x1000, scoped, tag = 'input window, operand 2, single buffered']
    #allocation8 [shape = 'u8[8192]{0}', space=vmem, size = 0x2000, scoped, tag = 'output window, operand 0, single buffered']
    %8 = vsyncpa [#allocation3], 0
    %9 = vsyncpa [#allocation6], 0
    %10 = vsyncpa [#allocation4], 0
    // Predicated region
    $region2: #{tpu_custom_call.1} parent=1 // pred_check
      _
    $region3: #{tpu_custom_call.1} parent=1 // pred_check_branch
      %12 = sbr.rel (0) target = $region5
    $region4: #{tpu_custom_call.1} parent=1 // pred_region
      %14 = vsyncadd [#allocation3], 0
      %s15 = sshll.u32 %s0, 4
      %s16 = int_to_ptr.hbm [resolvable:$true] %s15
      %s17 = sshll.u32 [#allocation2], 4
      %s18 = int_to_ptr.vmem [resolvable:$true] %s17
      %23 = dma.hbm_to_vmem [thread:$0]  %s16, 128, %s18, [#allocation3], 64, 64, 4
    $region5: #{tpu_custom_call.1} parent=1 // pred_fallthru
      _
    // Predicated region
    $region6: #{tpu_custom_call.1} parent=1 // pred_check
      _
    $region7: #{tpu_custom_call.1} parent=1 // pred_check_branch
      %25 = sbr.rel (0) target = $region9
    $region8: #{tpu_custom_call.1} parent=1 // pred_region
      %27 = vsyncadd [#allocation6], 0
      %s28 = sshll.u32 %s1, 4
      %s29 = int_to_ptr.hbm [resolvable:$true] %s28
      %s30 = sshll.u32 [#allocation5], 4
      %s31 = int_to_ptr.vmem [resolvable:$true] %s30
      %36 = dma.hbm_to_vmem [thread:$0]  %s29, 7168, %s31, [#allocation6], 64, 64, 4
    $region9: #{tpu_custom_call.1} parent=1 // pred_fallthru
      _
    // Predicated region
    $region10: #{tpu_custom_call.1} parent=1 // pred_check
      _
    $region11: #{tpu_custom_call.1} parent=1 // pred_check_branch
      %38 = sbr.rel (0) target = $region13
    $region12: #{tpu_custom_call.1} parent=1 // pred_region
      %40 = vsyncadd [#allocation6], 0
      %s41 = sshll.u32 %s2, 4
      %s42 = int_to_ptr.hbm [resolvable:$true] %s41
      %s43 = sshll.u32 [#allocation7], 4
      %s44 = int_to_ptr.vmem [resolvable:$true] %s43
      %49 = dma.hbm_to_vmem [thread:$0]  %s42, 112, %s44, [#allocation6], 16, 16, 1
    $region13: #{tpu_custom_call.1} parent=1 // pred_fallthru
      _
    // Predicated region
    $region14: #{tpu_custom_call.1} parent=1 // pred_check
      _
    $region15: #{tpu_custom_call.1} parent=1 // pred_check_branch
      %51 = sbr.rel (0) target = $region17
    $region16: #{tpu_custom_call.1} parent=1 // pred_region
      %53 = dma.done [#allocation3], 128
    $region17: #{tpu_custom_call.1} parent=1 // pred_fallthru
      _
    // Predicated region
    $region18: #{tpu_custom_call.1} parent=1 // pred_check
      _
    $region19: #{tpu_custom_call.1} parent=1 // pred_check_branch
      %55 = sbr.rel (0) target = $region21
    $region20: #{tpu_custom_call.1} parent=1 // pred_region
      %57 = dma.done [#allocation6], 7168
    $region21: #{tpu_custom_call.1} parent=1 // pred_fallthru
      _
    // Predicated region
    $region22: #{tpu_custom_call.1} parent=1 // pred_check
      _
    $region23: #{tpu_custom_call.1} parent=1 // pred_check_branch
      %59 = sbr.rel (0) target = $region25
    $region24: #{tpu_custom_call.1} parent=1 // pred_region
      %61 = dma.done [#allocation6], 112
    $region25: #{tpu_custom_call.1} parent=1 // pred_fallthru
      _
    %v62 = vld [vmem:[#allocation2] sm:$0xf]
    %v63 = vld [vmem:[#allocation2 + $0x4] sm:$0xf]
    %v64 = vld [vmem:[#allocation5] sm:$0xf]
    %v65 = vld [vmem:[#allocation5 + $0x4] sm:$0xf]
    %v66 = vld [vmem:[#allocation5 + $0x8] sm:$0xf]
    %v67 = vld [vmem:[#allocation5 + $0xc] sm:$0xf]
    %v68 = vld [vmem:[#allocation5 + $0x10] sm:$0xf]
    %v69 = vld [vmem:[#allocation5 + $0x14] sm:$0xf]
    %v70 = vld [vmem:[#allocation5 + $0x18] sm:$0xf]
    %v71 = vld [vmem:[#allocation5 + $0x1c] sm:$0xf]
    %v72 = vld [vmem:[#allocation5 + $0x20] sm:$0xf]
    %v73 = vld [vmem:[#allocation5 + $0x24] sm:$0xf]
    %v74 = vld [vmem:[#allocation5 + $0x28] sm:$0xf]
    %v75 = vld [vmem:[#allocation5 + $0x2c] sm:$0xf]
    %v76 = vld [vmem:[#allocation5 + $0x30] sm:$0xf]
    %v77 = vld [vmem:[#allocation5 + $0x34] sm:$0xf]
    %v78 = vld [vmem:[#allocation5 + $0x38] sm:$0xf]
    %v79 = vld [vmem:[#allocation5 + $0x3c] sm:$0xf]
    %v80 = vld [vmem:[#allocation7] sm:$0x1]
    %v82 = vperm.slane %v80, 0
    %v86 = vunpack.c.l.b16 %v62
    %v87 = vunpack.c.l.b16 %v63
    %v88 = vpack.c.b16 %v87, %v86
    %v106 = vunpack.c.l.b16 %v64
    %v107 = vunpack.c.l.b16 %v65
    %v108 = vunpack.c.l.b16 %v66
    %v109 = vunpack.c.l.b16 %v67
    %v110 = vunpack.c.l.b16 %v68
    %v111 = vunpack.c.l.b16 %v69
    %v112 = vunpack.c.l.b16 %v70
    %v113 = vunpack.c.l.b16 %v71
    %v114 = vunpack.c.l.b16 %v72
    %v115 = vunpack.c.l.b16 %v73
    %v116 = vunpack.c.l.b16 %v74
    %v117 = vunpack.c.l.b16 %v75
    %v118 = vunpack.c.l.b16 %v76
    %v119 = vunpack.c.l.b16 %v77
    %v120 = vunpack.c.l.b16 %v78
    %v121 = vunpack.c.l.b16 %v79
    %v122 = vpack.c.b16 %v107, %v106
    %v123 = vpack.c.b16 %v109, %v108
    %v124 = vpack.c.b16 %v111, %v110
    %v125 = vpack.c.b16 %v113, %v112
    %v126 = vpack.c.b16 %v115, %v114
    %v127 = vpack.c.b16 %v117, %v116
    %v128 = vpack.c.b16 %v119, %v118
    %v129 = vpack.c.b16 %v121, %v120
    %138 = vmatpush.bf16.msra.mxu0 %v129
    %139 = vmatpush.bf16.msra.mxu0 %v128
    %140 = vmatpush.bf16.msra.mxu0 %v127
    %141 = vmatpush.bf16.msra.mxu0 %v126
    %142 = vmatpush.bf16.msra.mxu0 %v125
    %143 = vmatpush.bf16.msra.mxu0 %v124
    %144 = vmatpush.bf16.msra.mxu0 %v123
    %145 = vmatpush.bf16.msra.mxu0 %v122
    %146 = vmatmul.bf16.gmra.mxu0 %v88
    %v147 = vpop.f32.mrf.mxu0
    %v148 = vadd.f32 %v82, %v147
    %v149 = vpop.f32.mrf.mxu0
    %v150 = vadd.f32 %v82, %v149
    %151 = vdwg.mxu0
    %v152 = vmax.f32 %v148, 0.0
    %v153 = vmax.f32 %v150, 0.0
    %v154 = vpack.c.bf16 %v153, %v152
    %s155 = scalar_lea.vmem [#allocation5], 64
    %v156 = vld [vmem:[%s155] sm:$0xf]
    %v157 = vld [vmem:[%s155 + $0x4] sm:$0xf]
    %v158 = vld [vmem:[%s155 + $0x8] sm:$0xf]
    %v159 = vld [vmem:[%s155 + $0xc] sm:$0xf]
    %v160 = vld [vmem:[%s155 + $0x10] sm:$0xf]
    %v161 = vld [vmem:[%s155 + $0x14] sm:$0xf]
    %v162 = vld [vmem:[%s155 + $0x18] sm:$0xf]
    %v163 = vld [vmem:[%s155 + $0x1c] sm:$0xf]
    %v164 = vld [vmem:[%s155 + $0x20] sm:$0xf]
    %v165 = vld [vmem:[%s155 + $0x24] sm:$0xf]
    %v166 = vld [vmem:[%s155 + $0x28] sm:$0xf]
    %v167 = vld [vmem:[%s155 + $0x2c] sm:$0xf]
    %v168 = vld [vmem:[%s155 + $0x30] sm:$0xf]
    %v169 = vld [vmem:[%s155 + $0x34] sm:$0xf]
    %v170 = vld [vmem:[%s155 + $0x38] sm:$0xf]
    %v171 = vld [vmem:[%s155 + $0x3c] sm:$0xf]
    %s172 = scalar_lea.vmem [#allocation7], 1
    %v173 = vld [vmem:[%s172] sm:$0x1]
    %v175 = vperm.slane %v173, 0
    %v193 = vunpack.c.l.b16 %v156
    %v194 = vunpack.c.l.b16 %v157
    %v195 = vunpack.c.l.b16 %v158
    %v196 = vunpack.c.l.b16 %v159
    %v197 = vunpack.c.l.b16 %v160
    %v198 = vunpack.c.l.b16 %v161
    %v199 = vunpack.c.l.b16 %v162
    %v200 = vunpack.c.l.b16 %v163
    %v201 = vunpack.c.l.b16 %v164
    %v202 = vunpack.c.l.b16 %v165
    %v203 = vunpack.c.l.b16 %v166
    %v204 = vunpack.c.l.b16 %v167
    %v205 = vunpack.c.l.b16 %v168
    %v206 = vunpack.c.l.b16 %v169
    %v207 = vunpack.c.l.b16 %v170
    %v208 = vunpack.c.l.b16 %v171
    %v209 = vpack.c.b16 %v194, %v193
    %v210 = vpack.c.b16 %v196, %v195
    %v211 = vpack.c.b16 %v198, %v197
    %v212 = vpack.c.b16 %v200, %v199
    %v213 = vpack.c.b16 %v202, %v201
    %v214 = vpack.c.b16 %v204, %v203
    %v215 = vpack.c.b16 %v206, %v205
    %v216 = vpack.c.b16 %v208, %v207
    %225 = vmatpush.bf16.msra.mxu0 %v216
    %226 = vmatpush.bf16.msra.mxu0 %v215
    %227 = vmatpush.bf16.msra.mxu0 %v214
    %228 = vmatpush.bf16.msra.mxu0 %v213
    %229 = vmatpush.bf16.msra.mxu0 %v212
    %230 = vmatpush.bf16.msra.mxu0 %v211
    %231 = vmatpush.bf16.msra.mxu0 %v210
    %232 = vmatpush.bf16.msra.mxu0 %v209
    %233 = vmatmul.bf16.gmra.mxu0 %v154
    %v234 = vpop.f32.mrf.mxu0
    %v235 = vadd.f32 %v175, %v234
    %v236 = vpop.f32.mrf.mxu0
    %v237 = vadd.f32 %v175, %v236
    %238 = vdwg.mxu0
    %v239 = vmax.f32 %v235, 0.0
    %v240 = vmax.f32 %v237, 0.0
    %v241 = vpack.c.bf16 %v240, %v239
    %s242 = scalar_lea.vmem [#allocation5], 128
    %v243 = vld [vmem:[%s242] sm:$0xf]
    %v244 = vld [vmem:[%s242 + $0x4] sm:$0xf]
    %v245 = vld [vmem:[%s242 + $0x8] sm:$0xf]
    %v246 = vld [vmem:[%s242 + $0xc] sm:$0xf]
    %v247 = vld [vmem:[%s242 + $0x10] sm:$0xf]
    %v248 = vld [vmem:[%s242 + $0x14] sm:$0xf]
    %v249 = vld [vmem:[%s242 + $0x18] sm:$0xf]
    %v250 = vld [vmem:[%s242 + $0x1c] sm:$0xf]
    %v251 = vld [vmem:[%s242 + $0x20] sm:$0xf]
    %v252 = vld [vmem:[%s242 + $0x24] sm:$0xf]
    %v253 = vld [vmem:[%s242 + $0x28] sm:$0xf]
    %v254 = vld [vmem:[%s242 + $0x2c] sm:$0xf]
    %v255 = vld [vmem:[%s242 + $0x30] sm:$0xf]
    %v256 = vld [vmem:[%s242 + $0x34] sm:$0xf]
    %v257 = vld [vmem:[%s242 + $0x38] sm:$0xf]
    %v258 = vld [vmem:[%s242 + $0x3c] sm:$0xf]
    %s259 = scalar_lea.vmem [#allocation7], 2
    %v260 = vld [vmem:[%s259] sm:$0x1]
    %v262 = vperm.slane %v260, 0
    %v280 = vunpack.c.l.b16 %v243
    %v281 = vunpack.c.l.b16 %v244
    %v282 = vunpack.c.l.b16 %v245
    %v283 = vunpack.c.l.b16 %v246
    %v284 = vunpack.c.l.b16 %v247
    %v285 = vunpack.c.l.b16 %v248
    %v286 = vunpack.c.l.b16 %v249
    %v287 = vunpack.c.l.b16 %v250
    %v288 = vunpack.c.l.b16 %v251
    %v289 = vunpack.c.l.b16 %v252
    %v290 = vunpack.c.l.b16 %v253
    %v291 = vunpack.c.l.b16 %v254
    %v292 = vunpack.c.l.b16 %v255
    %v293 = vunpack.c.l.b16 %v256
    %v294 = vunpack.c.l.b16 %v257
    %v295 = vunpack.c.l.b16 %v258
    %v296 = vpack.c.b16 %v281, %v280
    %v297 = vpack.c.b16 %v283, %v282
    %v298 = vpack.c.b16 %v285, %v284
    %v299 = vpack.c.b16 %v287, %v286
    %v300 = vpack.c.b16 %v289, %v288
    %v301 = vpack.c.b16 %v291, %v290
    %v302 = vpack.c.b16 %v293, %v292
    %v303 = vpack.c.b16 %v295, %v294
    %312 = vmatpush.bf16.msra.mxu0 %v303
    %313 = vmatpush.bf16.msra.mxu0 %v302
    %314 = vmatpush.bf16.msra.mxu0 %v301
    %315 = vmatpush.bf16.msra.mxu0 %v300
    %316 = vmatpush.bf16.msra.mxu0 %v299
    %317 = vmatpush.bf16.msra.mxu0 %v298
    %318 = vmatpush.bf16.msra.mxu0 %v297
    %319 = vmatpush.bf16.msra.mxu0 %v296
    %320 = vmatmul.bf16.gmra.mxu0 %v241
    %v321 = vpop.f32.mrf.mxu0
    %v322 = vadd.f32 %v262, %v321
    %v323 = vpop.f32.mrf.mxu0
    %v324 = vadd.f32 %v262, %v323
    %325 = vdwg.mxu0
    %v326 = vmax.f32 %v322, 0.0
    %v327 = vmax.f32 %v324, 0.0
    %v328 = vpack.c.bf16 %v327, %v326
    %s329 = scalar_lea.vmem [#allocation5], 192
    %v330 = vld [vmem:[%s329] sm:$0xf]
    %v331 = vld [vmem:[%s329 + $0x4] sm:$0xf]
    %v332 = vld [vmem:[%s329 + $0x8] sm:$0xf]
    %v333 = vld [vmem:[%s329 + $0xc] sm:$0xf]
    %v334 = vld [vmem:[%s329 + $0x10] sm:$0xf]
    %v335 = vld [vmem:[%s329 + $0x14] sm:$0xf]
    %v336 = vld [vmem:[%s329 + $0x18] sm:$0xf]
    %v337 = vld [vmem:[%s329 + $0x1c] sm:$0xf]
    %v338 = vld [vmem:[%s329 + $0x20] sm:$0xf]
    %v339 = vld [vmem:[%s329 + $0x24] sm:$0xf]
    %v340 = vld [vmem:[%s329 + $0x28] sm:$0xf]
    %v341 = vld [vmem:[%s329 + $0x2c] sm:$0xf]
    %v342 = vld [vmem:[%s329 + $0x30] sm:$0xf]
    %v343 = vld [vmem:[%s329 + $0x34] sm:$0xf]
    %v344 = vld [vmem:[%s329 + $0x38] sm:$0xf]
    %v345 = vld [vmem:[%s329 + $0x3c] sm:$0xf]
    %s346 = scalar_lea.vmem [#allocation7], 3
    %v347 = vld [vmem:[%s346] sm:$0x1]
    %v349 = vperm.slane %v347, 0
    %v367 = vunpack.c.l.b16 %v330
    %v368 = vunpack.c.l.b16 %v331
    %v369 = vunpack.c.l.b16 %v332
    %v370 = vunpack.c.l.b16 %v333
    %v371 = vunpack.c.l.b16 %v334
    %v372 = vunpack.c.l.b16 %v335
    %v373 = vunpack.c.l.b16 %v336
    %v374 = vunpack.c.l.b16 %v337
    %v375 = vunpack.c.l.b16 %v338
    %v376 = vunpack.c.l.b16 %v339
    %v377 = vunpack.c.l.b16 %v340
    %v378 = vunpack.c.l.b16 %v341
    %v379 = vunpack.c.l.b16 %v342
    %v380 = vunpack.c.l.b16 %v343
    %v381 = vunpack.c.l.b16 %v344
    %v382 = vunpack.c.l.b16 %v345
    %v383 = vpack.c.b16 %v368, %v367
    %v384 = vpack.c.b16 %v370, %v369
    %v385 = vpack.c.b16 %v372, %v371
    %v386 = vpack.c.b16 %v374, %v373
    %v387 = vpack.c.b16 %v376, %v375
    %v388 = vpack.c.b16 %v378, %v377
    %v389 = vpack.c.b16 %v380, %v379
    %v390 = vpack.c.b16 %v382, %v381
    %399 = vmatpush.bf16.msra.mxu0 %v390
    %400 = vmatpush.bf16.msra.mxu0 %v389
    %401 = vmatpush.bf16.msra.mxu0 %v388
    %402 = vmatpush.bf16.msra.mxu0 %v387
    %403 = vmatpush.bf16.msra.mxu0 %v386
    %404 = vmatpush.bf16.msra.mxu0 %v385
    %405 = vmatpush.bf16.msra.mxu0 %v384
    %406 = vmatpush.bf16.msra.mxu0 %v383
    %407 = vmatmul.bf16.gmra.mxu0 %v328
    %v408 = vpop.f32.mrf.mxu0
    %v409 = vadd.f32 %v349, %v408
    %v410 = vpop.f32.mrf.mxu0
    %v411 = vadd.f32 %v349, %v410
    %412 = vdwg.mxu0
    %v413 = vmax.f32 %v409, 0.0
    %v414 = vmax.f32 %v411, 0.0
    %v415 = vpack.c.bf16 %v414, %v413
    %s416 = scalar_lea.vmem [#allocation5], 256
    %v417 = vld [vmem:[%s416] sm:$0xf]
    %v418 = vld [vmem:[%s416 + $0x4] sm:$0xf]
    %v419 = vld [vmem:[%s416 + $0x8] sm:$0xf]
    %v420 = vld [vmem:[%s416 + $0xc] sm:$0xf]
    %v421 = vld [vmem:[%s416 + $0x10] sm:$0xf]
    %v422 = vld [vmem:[%s416 + $0x14] sm:$0xf]
    %v423 = vld [vmem:[%s416 + $0x18] sm:$0xf]
    %v424 = vld [vmem:[%s416 + $0x1c] sm:$0xf]
    %v425 = vld [vmem:[%s416 + $0x20] sm:$0xf]
    %v426 = vld [vmem:[%s416 + $0x24] sm:$0xf]
    %v427 = vld [vmem:[%s416 + $0x28] sm:$0xf]
    %v428 = vld [vmem:[%s416 + $0x2c] sm:$0xf]
    %v429 = vld [vmem:[%s416 + $0x30] sm:$0xf]
    %v430 = vld [vmem:[%s416 + $0x34] sm:$0xf]
    %v431 = vld [vmem:[%s416 + $0x38] sm:$0xf]
    %v432 = vld [vmem:[%s416 + $0x3c] sm:$0xf]
    %s433 = scalar_lea.vmem [#allocation7], 4
    %v434 = vld [vmem:[%s433] sm:$0x1]
    %v436 = vperm.slane %v434, 0
    %v454 = vunpack.c.l.b16 %v417
    %v455 = vunpack.c.l.b16 %v418
    %v456 = vunpack.c.l.b16 %v419
    %v457 = vunpack.c.l.b16 %v420
    %v458 = vunpack.c.l.b16 %v421
    %v459 = vunpack.c.l.b16 %v422
    %v460 = vunpack.c.l.b16 %v423
    %v461 = vunpack.c.l.b16 %v424
    %v462 = vunpack.c.l.b16 %v425
    %v463 = vunpack.c.l.b16 %v426
    %v464 = vunpack.c.l.b16 %v427
    %v465 = vunpack.c.l.b16 %v428
    %v466 = vunpack.c.l.b16 %v429
    %v467 = vunpack.c.l.b16 %v430
    %v468 = vunpack.c.l.b16 %v431
    %v469 = vunpack.c.l.b16 %v432
    %v470 = vpack.c.b16 %v455, %v454
    %v471 = vpack.c.b16 %v457, %v456
    %v472 = vpack.c.b16 %v459, %v458
    %v473 = vpack.c.b16 %v461, %v460
    %v474 = vpack.c.b16 %v463, %v462
    %v475 = vpack.c.b16 %v465, %v464
    %v476 = vpack.c.b16 %v467, %v466
    %v477 = vpack.c.b16 %v469, %v468
    %486 = vmatpush.bf16.msra.mxu0 %v477
    %487 = vmatpush.bf16.msra.mxu0 %v476
    %488 = vmatpush.bf16.msra.mxu0 %v475
    %489 = vmatpush.bf16.msra.mxu0 %v474
    %490 = vmatpush.bf16.msra.mxu0 %v473
    %491 = vmatpush.bf16.msra.mxu0 %v472
    %492 = vmatpush.bf16.msra.mxu0 %v471
    %493 = vmatpush.bf16.msra.mxu0 %v470
    %494 = vmatmul.bf16.gmra.mxu0 %v415
    %v495 = vpop.f32.mrf.mxu0
    %v496 = vadd.f32 %v436, %v495
    %v497 = vpop.f32.mrf.mxu0
    %v498 = vadd.f32 %v436, %v497
    %499 = vdwg.mxu0
    %v500 = vmax.f32 %v496, 0.0
    %v501 = vmax.f32 %v498, 0.0
    %v502 = vpack.c.bf16 %v501, %v500
    %s503 = scalar_lea.vmem [#allocation5], 320
    %v504 = vld [vmem:[%s503] sm:$0xf]
    %v505 = vld [vmem:[%s503 + $0x4] sm:$0xf]
    %v506 = vld [vmem:[%s503 + $0x8] sm:$0xf]
    %v507 = vld [vmem:[%s503 + $0xc] sm:$0xf]
    %v508 = vld [vmem:[%s503 + $0x10] sm:$0xf]
    %v509 = vld [vmem:[%s503 + $0x14] sm:$0xf]
    %v510 = vld [vmem:[%s503 + $0x18] sm:$0xf]
    %v511 = vld [vmem:[%s503 + $0x1c] sm:$0xf]
    %v512 = vld [vmem:[%s503 + $0x20] sm:$0xf]
    %v513 = vld [vmem:[%s503 + $0x24] sm:$0xf]
    %v514 = vld [vmem:[%s503 + $0x28] sm:$0xf]
    %v515 = vld [vmem:[%s503 + $0x2c] sm:$0xf]
    %v516 = vld [vmem:[%s503 + $0x30] sm:$0xf]
    %v517 = vld [vmem:[%s503 + $0x34] sm:$0xf]
    %v518 = vld [vmem:[%s503 + $0x38] sm:$0xf]
    %v519 = vld [vmem:[%s503 + $0x3c] sm:$0xf]
    %s520 = scalar_lea.vmem [#allocation7], 5
    %v521 = vld [vmem:[%s520] sm:$0x1]
    %v523 = vperm.slane %v521, 0
    %v541 = vunpack.c.l.b16 %v504
    %v542 = vunpack.c.l.b16 %v505
    %v543 = vunpack.c.l.b16 %v506
    %v544 = vunpack.c.l.b16 %v507
    %v545 = vunpack.c.l.b16 %v508
    %v546 = vunpack.c.l.b16 %v509
    %v547 = vunpack.c.l.b16 %v510
    %v548 = vunpack.c.l.b16 %v511
    %v549 = vunpack.c.l.b16 %v512
    %v550 = vunpack.c.l.b16 %v513
    %v551 = vunpack.c.l.b16 %v514
    %v552 = vunpack.c.l.b16 %v515
    %v553 = vunpack.c.l.b16 %v516
    %v554 = vunpack.c.l.b16 %v517
    %v555 = vunpack.c.l.b16 %v518
    %v556 = vunpack.c.l.b16 %v519
    %v557 = vpack.c.b16 %v542, %v541
    %v558 = vpack.c.b16 %v544, %v543
    %v559 = vpack.c.b16 %v546, %v545
    %v560 = vpack.c.b16 %v548, %v547
    %v561 = vpack.c.b16 %v550, %v549
    %v562 = vpack.c.b16 %v552, %v551
    %v563 = vpack.c.b16 %v554, %v553
    %v564 = vpack.c.b16 %v556, %v555
    %573 = vmatpush.bf16.msra.mxu0 %v564
    %574 = vmatpush.bf16.msra.mxu0 %v563
    %575 = vmatpush.bf16.msra.mxu0 %v562
    %576 = vmatpush.bf16.msra.mxu0 %v561
    %577 = vmatpush.bf16.msra.mxu0 %v560
    %578 = vmatpush.bf16.msra.mxu0 %v559
    %579 = vmatpush.bf16.msra.mxu0 %v558
    %580 = vmatpush.bf16.msra.mxu0 %v557
    %581 = vmatmul.bf16.gmra.mxu0 %v502
    %v582 = vpop.f32.mrf.mxu0
    %v583 = vadd.f32 %v523, %v582
    %v584 = vpop.f32.mrf.mxu0
    %v585 = vadd.f32 %v523, %v584
    %586 = vdwg.mxu0
    %v587 = vmax.f32 %v583, 0.0
    %v588 = vmax.f32 %v585, 0.0
    %v589 = vpack.c.bf16 %v588, %v587
    %s590 = scalar_lea.vmem [#allocation5], 384
    %v591 = vld [vmem:[%s590] sm:$0xf]
    %v592 = vld [vmem:[%s590 + $0x4] sm:$0xf]
    %v593 = vld [vmem:[%s590 + $0x8] sm:$0xf]
    %v594 = vld [vmem:[%s590 + $0xc] sm:$0xf]
    %v595 = vld [vmem:[%s590 + $0x10] sm:$0xf]
    %v596 = vld [vmem:[%s590 + $0x14] sm:$0xf]
    %v597 = vld [vmem:[%s590 + $0x18] sm:$0xf]
    %v598 = vld [vmem:[%s590 + $0x1c] sm:$0xf]
    %v599 = vld [vmem:[%s590 + $0x20] sm:$0xf]
    %v600 = vld [vmem:[%s590 + $0x24] sm:$0xf]
    %v601 = vld [vmem:[%s590 + $0x28] sm:$0xf]
    %v602 = vld [vmem:[%s590 + $0x2c] sm:$0xf]
    %v603 = vld [vmem:[%s590 + $0x30] sm:$0xf]
    %v604 = vld [vmem:[%s590 + $0x34] sm:$0xf]
    %v605 = vld [vmem:[%s590 + $0x38] sm:$0xf]
    %v606 = vld [vmem:[%s590 + $0x3c] sm:$0xf]
    %s607 = scalar_lea.vmem [#allocation7], 6
    %v608 = vld [vmem:[%s607] sm:$0x1]
    %v610 = vperm.slane %v608, 0
    %v628 = vunpack.c.l.b16 %v591
    %v629 = vunpack.c.l.b16 %v592
    %v630 = vunpack.c.l.b16 %v593
    %v631 = vunpack.c.l.b16 %v594
    %v632 = vunpack.c.l.b16 %v595
    %v633 = vunpack.c.l.b16 %v596
    %v634 = vunpack.c.l.b16 %v597
    %v635 = vunpack.c.l.b16 %v598
    %v636 = vunpack.c.l.b16 %v599
    %v637 = vunpack.c.l.b16 %v600
    %v638 = vunpack.c.l.b16 %v601
    %v639 = vunpack.c.l.b16 %v602
    %v640 = vunpack.c.l.b16 %v603
    %v641 = vunpack.c.l.b16 %v604
    %v642 = vunpack.c.l.b16 %v605
    %v643 = vunpack.c.l.b16 %v606
    %v644 = vpack.c.b16 %v629, %v628
    %v645 = vpack.c.b16 %v631, %v630
    %v646 = vpack.c.b16 %v633, %v632
    %v647 = vpack.c.b16 %v635, %v634
    %v648 = vpack.c.b16 %v637, %v636
    %v649 = vpack.c.b16 %v639, %v638
    %v650 = vpack.c.b16 %v641, %v640
    %v651 = vpack.c.b16 %v643, %v642
    %660 = vmatpush.bf16.msra.mxu0 %v651
    %661 = vmatpush.bf16.msra.mxu0 %v650
    %662 = vmatpush.bf16.msra.mxu0 %v649
    %663 = vmatpush.bf16.msra.mxu0 %v648
    %664 = vmatpush.bf16.msra.mxu0 %v647
    %665 = vmatpush.bf16.msra.mxu0 %v646
    %666 = vmatpush.bf16.msra.mxu0 %v645
    %667 = vmatpush.bf16.msra.mxu0 %v644
    %668 = vmatmul.bf16.gmra.mxu0 %v589
    %v669 = vpop.f32.mrf.mxu0
    %v670 = vadd.f32 %v610, %v669
    %v671 = vpop.f32.mrf.mxu0
    %v672 = vadd.f32 %v610, %v671
    %673 = vdwg.mxu0
    %674 = vst [vmem:[#allocation8] sm:$0xff] %v670
    %675 = vst [vmem:[#allocation8 + $0x8] sm:$0xff] %v672
    // Predicated region
    $region26: #{tpu_custom_call.1} parent=1 // pred_check
      _
    $region27: #{tpu_custom_call.1} parent=1 // pred_check_branch
      %677 = sbr.rel (0) target = $region29
    $region28: #{tpu_custom_call.1} parent=1 // pred_region
      %679 = vsyncadd [#allocation4], 0
      %s680 = sshll.u32 [#allocation8], 4
      %s681 = int_to_ptr.vmem [resolvable:$true] %s680
      %s682 = sshll.u32 %s3, 4
      %s683 = int_to_ptr.hbm [resolvable:$true] %s682
      %688 = dma.vmem_to_hbm [thread:$0]  %s681, 256, %s683, [#allocation4], 128, 128, 8
    $region29: #{tpu_custom_call.1} parent=1 // pred_fallthru
      _
    // Predicated region
    $region30: #{tpu_custom_call.1} parent=1 // pred_check
      _
    $region31: #{tpu_custom_call.1} parent=1 // pred_check_branch
      %690 = sbr.rel (0) target = $region33
    $region32: #{tpu_custom_call.1} parent=1 // pred_region
      %692 = dma.done [#allocation4], 256
    $region33: #{tpu_custom_call.1} parent=1 // pred_fallthru
      _
    %693 = vsyncpa [#allocation3], 1
    %694 = vsyncpa [#allocation6], 1
    %695 = vsyncpa [#allocation4], 1

</llo_original>
